<compile_context>
chip_gen: v6e
topology: v6e:2x2x1
jax: 0.10.0
libtpu: 0.0.40
codegen_flags: <defaults>
</compile_context>

<pallas_src>
import math
import jax
import jax.numpy as jnp
from jax.experimental import pallas as pl
from jax.experimental.pallas import tpu as pltpu

HIDDEN_SIZE = 64
NUM_CLASSES = 1
OUT_LANES = 128          # lane-dense output width (>= NUM_CLASSES)
DEFAULT_BLOCK_ROWS = 512 # batch tile at scale (>=512 rows ~ HBM roofline on v6e)


def mlp_kernel(x_ref, w1_ref, b1_ref, w2_ref, b2_ref, w3_ref, b3_ref, o_ref):
    # fc1 + ReLU  (bf16 operands, f32 accumulate; elementwise math in f32)
    h1 = jnp.dot(x_ref[...], w1_ref[...], preferred_element_type=jnp.float32)
    h1 = jnp.maximum(h1 + b1_ref[...], 0.0)
    # fc2 + ReLU
    h2 = jnp.dot(h1.astype(jnp.bfloat16), w2_ref[...],
                 preferred_element_type=jnp.float32)
    h2 = jnp.maximum(h2 + b2_ref[...], 0.0)
    # fc3 (output padded to 128 lanes -> unmasked, lane-dense stores)
    out = jnp.dot(h2.astype(jnp.bfloat16), w3_ref[...],
                  preferred_element_type=jnp.float32)
    o_ref[...] = (out + b3_ref[...]).astype(o_ref.dtype)


def neural_net_forward(x, w1, b1, w2, b2, w3, b3, *, block_rows=DEFAULT_BLOCK_ROWS):
    """Forward pass of NeuralNet as one Pallas TPU kernel.

    x:  (B, input_size) f32
    w1: (input_size, hidden) f32, b1: (1, hidden) f32
    w2: (hidden, hidden) f32,     b2: (1, hidden) f32
    w3: (hidden, num_classes),    b3: (1, num_classes)
    returns (B, num_classes) f32
    """
    B, F = x.shape
    H = w1.shape[1]
    n_out = w3.shape[1]

    # --- lane-dense output: pad fc3 weights/bias to OUT_LANES columns -------
    w3p = jnp.zeros((H, OUT_LANES), jnp.float32).at[:, :n_out].set(w3)
    b3p = jnp.zeros((1, OUT_LANES), jnp.float32).at[:, :n_out].set(b3)

    # --- batch tile: multiple of 8 sublanes, capped at block_rows -----------
    tb = min(block_rows, ((B + 7) // 8) * 8)
    b_pad = pl.cdiv(B, tb) * tb
    if b_pad != B:
        x = jnp.pad(x, ((0, b_pad - B), (0, 0)))

    # --- bf16 matmul operands (f32 accumulation inside the kernel) ----------
    xb = x.astype(jnp.bfloat16)
    w1b = w1.astype(jnp.bfloat16)
    w2b = w2.astype(jnp.bfloat16)
    w3b = w3p.astype(jnp.bfloat16)

    resident = lambda shape: pl.BlockSpec(shape, lambda i: (0, 0))  # stays in VMEM
    grid = (b_pad // tb,)

    out = pl.pallas_call(
        mlp_kernel,
        out_shape=jax.ShapeDtypeStruct((b_pad, OUT_LANES), jnp.float32),
        grid=grid,
        in_specs=[
            pl.BlockSpec((tb, F), lambda i: (i, 0)),   # streamed activations
            resident((F, H)),
            resident((1, H)),
            resident((H, H)),
            resident((1, H)),
            resident((H, OUT_LANES)),
            resident((1, OUT_LANES)),
        ],
        out_specs=pl.BlockSpec((tb, OUT_LANES), lambda i: (i, 0)),
        compiler_params=pltpu.CompilerParams(
            dimension_semantics=("parallel",),  # shard batch tiles across TCs on v7x
        ),
    )(xb, w1b, b1, w2b, b2, w3b, b3p)

    return out[:B, :n_out]


def init_linear_params(key, fan_in, fan_out):
    # Mirrors PyTorch nn.Linear's uniform(-1/sqrt(fan_in), 1/sqrt(fan_in)) init.
    kw, kb = jax.random.split(key)
    bound = 1.0 / math.sqrt(fan_in)
    w = jax.random.uniform(kw, (fan_in, fan_out), jnp.float32, -bound, bound)
    b = jax.random.uniform(kb, (1, fan_out), jnp.float32, -bound, bound)
    return w, b


if __name__ == "__main__":
    key = jax.random.PRNGKey(0)
    k_x, k1, k2, k3 = jax.random.split(key, 4)

    batch = 8
    input_size = 32  # synthetic stand-in for len(X_train[0])

    x = jax.random.normal(k_x, (batch, input_size), jnp.float32)

    w1, b1 = init_linear_params(k1, input_size, HIDDEN_SIZE)
    w2, b2 = init_linear_params(k2, HIDDEN_SIZE, HIDDEN_SIZE)
    w3, b3 = init_linear_params(k3, HIDDEN_SIZE, NUM_CLASSES)

    out = neural_net_forward(x, w1, b1, w2, b2, w3, b3)
    out = jax.block_until_ready(out)

    # Reference in plain JAX with the same bf16-operand / f32-accumulate math.
    xb = x.astype(jnp.bfloat16)
    h = jnp.maximum(
        jnp.dot(xb, w1.astype(jnp.bfloat16), preferred_element_type=jnp.float32) + b1, 0.0)
    h = jnp.maximum(
        jnp.dot(h.astype(jnp.bfloat16), w2.astype(jnp.bfloat16),
                preferred_element_type=jnp.float32) + b2, 0.0)
    ref = jnp.dot(h.astype(jnp.bfloat16), w3.astype(jnp.bfloat16),
                  preferred_element_type=jnp.float32) + b3

    assert out.shape == (batch, NUM_CLASSES)
    assert jnp.allclose(out, ref, atol=1e-2, rtol=1e-2)
    # Sanity vs full-f32 math (loose tolerance for bf16 operands).
    h32 = jnp.maximum(x @ w1 + b1, 0.0)
    h32 = jnp.maximum(h32 @ w2 + b2, 0.0)
    ref32 = h32 @ w3 + b3
    assert jnp.allclose(out, ref32, atol=5e-2, rtol=5e-2)

    print("KERNEL_OK")
</pallas_src>

<mosaic_0001>
module attributes {stable_mosaic.version = 11 : i64} {
  func.func @mlp_kernel(%arg0: i32, %arg1: memref<8x32xbf16, #tpu.memory_space<vmem>>, %arg2: memref<32x64xbf16, #tpu.memory_space<vmem>>, %arg3: memref<1x64xf32, #tpu.memory_space<vmem>>, %arg4: memref<64x64xbf16, #tpu.memory_space<vmem>>, %arg5: memref<1x64xf32, #tpu.memory_space<vmem>>, %arg6: memref<64x128xbf16, #tpu.memory_space<vmem>>, %arg7: memref<1x128xf32, #tpu.memory_space<vmem>>, %arg8: memref<8x128xf32, #tpu.memory_space<vmem>>) attributes {dimension_semantics = [#tpu.dimension_semantics<parallel>], iteration_bounds = array<i64: 1>, scalar_prefetch = 0 : i64, scratch_operands = 0 : i64, tpu.core_type = #tpu.core_type<tc>, window_params = [{transform_indices = @transform_0, window_bounds = array<i64: 8, 32>}, {pipeline_mode = #tpu.pipeline_mode<synchronous>, transform_indices = @transform_1, window_bounds = array<i64: 32, 64>}, {pipeline_mode = #tpu.pipeline_mode<synchronous>, transform_indices = @transform_2, window_bounds = array<i64: 1, 64>}, {pipeline_mode = #tpu.pipeline_mode<synchronous>, transform_indices = @transform_3, window_bounds = array<i64: 64, 64>}, {pipeline_mode = #tpu.pipeline_mode<synchronous>, transform_indices = @transform_4, window_bounds = array<i64: 1, 64>}, {pipeline_mode = #tpu.pipeline_mode<synchronous>, transform_indices = @transform_5, window_bounds = array<i64: 64, 128>}, {pipeline_mode = #tpu.pipeline_mode<synchronous>, transform_indices = @transform_6, window_bounds = array<i64: 1, 128>}, {transform_indices = @transform_7, window_bounds = array<i64: 8, 128>}]} {
    %c0 = arith.constant 0 : index
    %c0_0 = arith.constant 0 : index
    %0 = vector.load %arg1[%c0, %c0_0] : memref<8x32xbf16, #tpu.memory_space<vmem>>, vector<8x32xbf16>
    %c0_1 = arith.constant 0 : index
    %c0_2 = arith.constant 0 : index
    %1 = vector.load %arg2[%c0_1, %c0_2] : memref<32x64xbf16, #tpu.memory_space<vmem>>, vector<32x64xbf16>
    %cst = arith.constant dense<0.000000e+00> : vector<8x64xf32>
    %2 = tpu.matmul %0, %1, %cst {dimension_numbers = #tpu.dot_dimension_numbers<[1], [0], [0], [1], [0, 0, 1, 1], [], []>} : vector<8x32xbf16>, vector<32x64xbf16>, vector<8x64xf32> -> vector<8x64xf32>
    %c0_3 = arith.constant 0 : index
    %c0_4 = arith.constant 0 : index
    %3 = vector.load %arg3[%c0_3, %c0_4] : memref<1x64xf32, #tpu.memory_space<vmem>>, vector<1x64xf32>
    %4 = vector.broadcast %3 : vector<1x64xf32> to vector<8x64xf32>
    %5 = arith.addf %2, %4 : vector<8x64xf32>
    %cst_5 = arith.constant 0.000000e+00 : f32
    %6 = vector.broadcast %cst_5 : f32 to vector<8x64xf32>
    %7 = arith.maximumf %5, %6 : vector<8x64xf32>
    %8 = arith.truncf %7 : vector<8x64xf32> to vector<8x64xbf16>
    %c0_6 = arith.constant 0 : index
    %c0_7 = arith.constant 0 : index
    %9 = vector.load %arg4[%c0_6, %c0_7] : memref<64x64xbf16, #tpu.memory_space<vmem>>, vector<64x64xbf16>
    %cst_8 = arith.constant dense<0.000000e+00> : vector<8x64xf32>
    %10 = tpu.matmul %8, %9, %cst_8 {dimension_numbers = #tpu.dot_dimension_numbers<[1], [0], [0], [1], [0, 0, 1, 1], [], []>} : vector<8x64xbf16>, vector<64x64xbf16>, vector<8x64xf32> -> vector<8x64xf32>
    %c0_9 = arith.constant 0 : index
    %c0_10 = arith.constant 0 : index
    %11 = vector.load %arg5[%c0_9, %c0_10] : memref<1x64xf32, #tpu.memory_space<vmem>>, vector<1x64xf32>
    %12 = vector.broadcast %11 : vector<1x64xf32> to vector<8x64xf32>
    %13 = arith.addf %10, %12 : vector<8x64xf32>
    %cst_11 = arith.constant 0.000000e+00 : f32
    %14 = vector.broadcast %cst_11 : f32 to vector<8x64xf32>
    %15 = arith.maximumf %13, %14 : vector<8x64xf32>
    %16 = arith.truncf %15 : vector<8x64xf32> to vector<8x64xbf16>
    %c0_12 = arith.constant 0 : index
    %c0_13 = arith.constant 0 : index
    %17 = vector.load %arg6[%c0_12, %c0_13] : memref<64x128xbf16, #tpu.memory_space<vmem>>, vector<64x128xbf16>
    %cst_14 = arith.constant dense<0.000000e+00> : vector<8x128xf32>
    %18 = tpu.matmul %16, %17, %cst_14 {dimension_numbers = #tpu.dot_dimension_numbers<[1], [0], [0], [1], [0, 0, 1, 1], [], []>} : vector<8x64xbf16>, vector<64x128xbf16>, vector<8x128xf32> -> vector<8x128xf32>
    %c0_15 = arith.constant 0 : index
    %c0_16 = arith.constant 0 : index
    %19 = vector.load %arg7[%c0_15, %c0_16] : memref<1x128xf32, #tpu.memory_space<vmem>>, vector<1x128xf32>
    %20 = vector.broadcast %19 : vector<1x128xf32> to vector<8x128xf32>
    %21 = arith.addf %18, %20 : vector<8x128xf32>
    %c0_17 = arith.constant 0 : index
    %c0_18 = arith.constant 0 : index
    %22 = vector.load %arg8[%c0_17, %c0_18] : memref<8x128xf32, #tpu.memory_space<vmem>>, vector<8x128xf32>
    tpu.vector_store %arg8[%c0_17, %c0_18], %21 {strides = array<i32>} : memref<8x128xf32, #tpu.memory_space<vmem>>, vector<8x128xf32>,
    return
  }
  func.func @transform_0(%arg0: i32) -> (i32, i32) {
    %c0_i32 = arith.constant 0 : i32
    %c0_i32_0 = arith.constant 0 : i32
    return %arg0, %c0_i32 : i32, i32
  }
  func.func @transform_1(%arg0: i32) -> (i32, i32) {
    %c0_i32 = arith.constant 0 : i32
    %c0_i32_0 = arith.constant 0 : i32
    %c0_i32_1 = arith.constant 0 : i32
    return %c0_i32, %c0_i32_0 : i32, i32
  }
  func.func @transform_2(%arg0: i32) -> (i32, i32) {
    %c0_i32 = arith.constant 0 : i32
    %c0_i32_0 = arith.constant 0 : i32
    %c0_i32_1 = arith.constant 0 : i32
    return %c0_i32, %c0_i32_0 : i32, i32
  }
  func.func @transform_3(%arg0: i32) -> (i32, i32) {
    %c0_i32 = arith.constant 0 : i32
    %c0_i32_0 = arith.constant 0 : i32
    %c0_i32_1 = arith.constant 0 : i32
    return %c0_i32, %c0_i32_0 : i32, i32
  }
  func.func @transform_4(%arg0: i32) -> (i32, i32) {
    %c0_i32 = arith.constant 0 : i32
    %c0_i32_0 = arith.constant 0 : i32
    %c0_i32_1 = arith.constant 0 : i32
    return %c0_i32, %c0_i32_0 : i32, i32
  }
  func.func @transform_5(%arg0: i32) -> (i32, i32) {
    %c0_i32 = arith.constant 0 : i32
    %c0_i32_0 = arith.constant 0 : i32
    %c0_i32_1 = arith.constant 0 : i32
    return %c0_i32, %c0_i32_0 : i32, i32
  }
  func.func @transform_6(%arg0: i32) -> (i32, i32) {
    %c0_i32 = arith.constant 0 : i32
    %c0_i32_0 = arith.constant 0 : i32
    %c0_i32_1 = arith.constant 0 : i32
    return %c0_i32, %c0_i32_0 : i32, i32
  }
  func.func @transform_7(%arg0: i32) -> (i32, i32) {
    %c0_i32 = arith.constant 0 : i32
    %c0_i32_0 = arith.constant 0 : i32
    return %arg0, %c0_i32 : i32, i32
  }
}

</mosaic_0001>

<llo_original>
// kernel: tpu_custom_call.1
$region0: #{tpu_custom_call.1}
  #allocation0 [shape = 'u32[]', space=smem, size = 0x4, offset = 0x4, fixed_abs, tag = 'smem constant byte address 0x4 - core index']
  #allocation1 [shape = 'u32[144,128]{1,0:T(1,128)}', space=vmem, size = 0x12000, scoped, tag = 'internal scratch']
  %s0 = inlined_call_operand.hbm [shape: bf16[8,32], index: 0, kind: input, shape index: {}]
  %s1 = inlined_call_operand.hbm [shape: bf16[32,64], index: 1, kind: input, shape index: {}]
  %s2 = inlined_call_operand.vmem [shape: f32[1,64], index: 2, kind: input, shape index: {}]
  %s3 = inlined_call_operand.hbm [shape: bf16[64,64], index: 3, kind: input, shape index: {}]
  %s4 = inlined_call_operand.vmem [shape: f32[1,64], index: 4, kind: input, shape index: {}]
  %s5 = inlined_call_operand.hbm [shape: bf16[64,128], index: 5, kind: input, shape index: {}]
  %s6 = inlined_call_operand.vmem [shape: f32[1,128], index: 6, kind: input, shape index: {}]
  %s7 = inlined_call_operand.hbm [shape: f32[8,128], index: 7, kind: output, shape index: {}]
  %s8 = sld [smem:[#allocation0]]
  $region54: #{tpu_custom_call.1} parent=0
    _
  %s10 = ssub.s32 1, %s8
  %s11 = scalar_select 0, %s10, %s8
  $region1: #{tpu_custom_call.1} parent=0
    #allocation2 [shape = 'u8[2048]{0}', space=vmem, size = 0x800, scoped, tag = 'input window, operand 0, single buffered']
    #allocation3 [shape = 's32[1]{0}', space=sflag, size = 0x4, scoped, tag = 'scoped memory for tpu_custom_call.1']
    #allocation4 [shape = 's32[1]{0}', space=sflag, size = 0x4, scoped, tag = 'scoped memory for tpu_custom_call.1']
    #allocation5 [shape = 'u8[8192]{0}', space=vmem, size = 0x2000, scoped, tag = 'input window, operand 1, single buffered']
    #allocation6 [shape = 's32[1]{0}', space=sflag, size = 0x4, scoped, tag = 'scoped memory for tpu_custom_call.1']
    #allocation7 [shape = 'u8[16384]{0}', space=vmem, size = 0x4000, scoped, tag = 'input window, operand 3, single buffered']
    #allocation8 [shape = 'u8[16384]{0}', space=vmem, size = 0x4000, scoped, tag = 'input window, operand 5, single buffered']
    #allocation9 [shape = 's32[1]{0}', space=sflag, size = 0x4, scoped, tag = 'scoped memory for tpu_custom_call.1']
    #allocation10 [shape = 'u8[4096]{0}', space=vmem, size = 0x1000, scoped, tag = 'output window, operand 0, single buffered']
    %12 = vsyncpa [#allocation3], 0
    %13 = vsyncpa [#allocation6], 0
    %14 = vsyncpa [#allocation9], 0
    %15 = vsyncpa [#allocation4], 0
    // Predicated region
    $region2: #{tpu_custom_call.1} parent=1 // pred_check
      _
    $region3: #{tpu_custom_call.1} parent=1 // pred_check_branch
      %17 = sbr.rel (0) target = $region5
    $region4: #{tpu_custom_call.1} parent=1 // pred_region
      %s19 = ssub.s32 64, 64
      %20 = vsyncadd [#allocation3], %s19
      %s22 = sshll.u32 [#allocation2], 4
      %s23 = int_to_ptr.vmem [resolvable:$true] %s22
      %25 = dma.hbm_to_vmem [thread:$0]  %s0, 64, %s23, [#allocation3]
    $region5: #{tpu_custom_call.1} parent=1 // pred_fallthru
      _
    // Predicated region
    $region6: #{tpu_custom_call.1} parent=1 // pred_check
      _
    $region7: #{tpu_custom_call.1} parent=1 // pred_check_branch
      %27 = sbr.rel (0) target = $region9
    $region8: #{tpu_custom_call.1} parent=1 // pred_region
      %s29 = ssub.s32 256, 256
      %30 = vsyncadd [#allocation6], %s29
      %s31 = sshll.u32 [#allocation5], 4
      %s32 = int_to_ptr.vmem [resolvable:$true] %s31
      %37 = dma.hbm_to_vmem [thread:$0]  %s1, 256, %s32, [#allocation6], 64, 64, 4
    $region9: #{tpu_custom_call.1} parent=1 // pred_fallthru
      _
    // Predicated region
    $region10: #{tpu_custom_call.1} parent=1 // pred_check
      _
    $region11: #{tpu_custom_call.1} parent=1 // pred_check_branch
      %39 = sbr.rel (0) target = $region13
    $region12: #{tpu_custom_call.1} parent=1 // pred_region
      _
    $region13: #{tpu_custom_call.1} parent=1 // pred_fallthru
      _
    // Predicated region
    $region14: #{tpu_custom_call.1} parent=1 // pred_check
      _
    $region15: #{tpu_custom_call.1} parent=1 // pred_check_branch
      %41 = sbr.rel (0) target = $region17
    $region16: #{tpu_custom_call.1} parent=1 // pred_region
      %s43 = ssub.s32 512, 512
      %44 = vsyncadd [#allocation6], %s43
      %s45 = sshll.u32 [#allocation7], 4
      %s46 = int_to_ptr.vmem [resolvable:$true] %s45
      %51 = dma.hbm_to_vmem [thread:$0]  %s3, 512, %s46, [#allocation6], 64, 64, 4
    $region17: #{tpu_custom_call.1} parent=1 // pred_fallthru
      _
    // Predicated region
    $region18: #{tpu_custom_call.1} parent=1 // pred_check
      _
    $region19: #{tpu_custom_call.1} parent=1 // pred_check_branch
      %53 = sbr.rel (0) target = $region21
    $region20: #{tpu_custom_call.1} parent=1 // pred_region
      _
    $region21: #{tpu_custom_call.1} parent=1 // pred_fallthru
      _
    // Predicated region
    $region22: #{tpu_custom_call.1} parent=1 // pred_check
      _
    $region23: #{tpu_custom_call.1} parent=1 // pred_check_branch
      %55 = sbr.rel (0) target = $region25
    $region24: #{tpu_custom_call.1} parent=1 // pred_region
      %s57 = ssub.s32 512, 512
      %58 = vsyncadd [#allocation9], %s57
      %s59 = sshll.u32 [#allocation8], 4
      %s60 = int_to_ptr.vmem [resolvable:$true] %s59
      %65 = dma.hbm_to_vmem [thread:$0]  %s5, 512, %s60, [#allocation9], 64, 64, 4
    $region25: #{tpu_custom_call.1} parent=1 // pred_fallthru
      _
    // Predicated region
    $region26: #{tpu_custom_call.1} parent=1 // pred_check
      _
    $region27: #{tpu_custom_call.1} parent=1 // pred_check_branch
      %67 = sbr.rel (0) target = $region29
    $region28: #{tpu_custom_call.1} parent=1 // pred_region
      _
    $region29: #{tpu_custom_call.1} parent=1 // pred_fallthru
      _
    // Predicated region
    $region30: #{tpu_custom_call.1} parent=1 // pred_check
      _
    $region31: #{tpu_custom_call.1} parent=1 // pred_check_branch
      %69 = sbr.rel (0) target = $region33
    $region32: #{tpu_custom_call.1} parent=1 // pred_region
      %70 = dma.done [#allocation3], 64
    $region33: #{tpu_custom_call.1} parent=1 // pred_fallthru
      _
    // Predicated region
    $region34: #{tpu_custom_call.1} parent=1 // pred_check
      _
    $region35: #{tpu_custom_call.1} parent=1 // pred_check_branch
      %72 = sbr.rel (0) target = $region37
    $region36: #{tpu_custom_call.1} parent=1 // pred_region
      %73 = dma.done [#allocation6], 256
    $region37: #{tpu_custom_call.1} parent=1 // pred_fallthru
      _
    // Predicated region
    $region38: #{tpu_custom_call.1} parent=1 // pred_check
      _
    $region39: #{tpu_custom_call.1} parent=1 // pred_check_branch
      %75 = sbr.rel (0) target = $region41
    $region40: #{tpu_custom_call.1} parent=1 // pred_region
      %76 = dma.done [#allocation6], 512
    $region41: #{tpu_custom_call.1} parent=1 // pred_fallthru
      _
    // Predicated region
    $region42: #{tpu_custom_call.1} parent=1 // pred_check
      _
    $region43: #{tpu_custom_call.1} parent=1 // pred_check_branch
      %78 = sbr.rel (0) target = $region45
    $region44: #{tpu_custom_call.1} parent=1 // pred_region
      %79 = dma.done [#allocation9], 512
    $region45: #{tpu_custom_call.1} parent=1 // pred_fallthru
      _
    %v81 = vld [vmem:[#allocation2] sm:$0xf]
    %v82 = vld [vmem:[#allocation5] sm:$0xf]
    %v83 = vld [vmem:[#allocation5 + $0x4] sm:$0xf]
    %v84 = vld [vmem:[#allocation5 + $0x8] sm:$0xf]
    %v85 = vld [vmem:[#allocation5 + $0xc] sm:$0xf]
    %v86 = vld [vmem:[%s2] sm:$0x1]
    %v88 = vlaneseq
    %v89 = vshrl.u32 %v88, 7
    %v90 = vsub.s32 0, %v89
    %v91 = vrot.slane %v86, %v90
    %v97 = vunpack.c.l.b16 %v82
    %v98 = vunpack.c.l.b16 %v83
    %v99 = vunpack.c.l.b16 %v84
    %v100 = vunpack.c.l.b16 %v85
    %v101 = vpack.c.b16 %v98, %v97
    %v102 = vpack.c.b16 %v100, %v99
    %vm105 = vcmask 261120
    %v107 = vsel %vm105, %v81, 0
    %109 = vmatprep.subr.bf16.mxu0 0
    %110 = vmatpush1.bf16.msra.mxu0 0
    %111 = vmatprep.subr.bf16.mxu0 0
    %112 = vmatpush1.bf16.msra.mxu0 0
    %113 = vmatprep.subr.bf16.mxu0 0
    %114 = vmatpush1.bf16.msra.mxu0 0
    %115 = vmatprep.subr.bf16.mxu0 0
    %116 = vmatpush1.bf16.msra.mxu0 0
    %117 = vmatprep.subr.bf16.mxu0 0
    %118 = vmatpush1.bf16.msra.mxu0 0
    %119 = vmatprep.subr.bf16.mxu0 0
    %120 = vmatpush1.bf16.msra.mxu0 0
    %121 = vmatprep.subr.bf16.mxu0 0
    %122 = vmatpush1.bf16.msra.mxu0 %v102
    %123 = vmatprep.subr.bf16.mxu0 0
    %124 = vmatpush1.bf16.msra.mxu0 %v101
    %125 = vmatprep.subr.bf16.mxu0 0
    %126 = vmatpush2.bf16.msra.mxu0 0
    %127 = vmatprep.subr.bf16.mxu0 0
    %128 = vmatpush2.bf16.msra.mxu0 0
    %129 = vmatprep.subr.bf16.mxu0 0
    %130 = vmatpush2.bf16.msra.mxu0 0
    %131 = vmatprep.subr.bf16.mxu0 0
    %132 = vmatpush2.bf16.msra.mxu0 0
    %133 = vmatprep.subr.bf16.mxu0 0
    %134 = vmatpush2.bf16.msra.mxu0 0
    %135 = vmatprep.subr.bf16.mxu0 0
    %136 = vmatpush2.bf16.msra.mxu0 0
    %137 = vmatprep.subr.bf16.mxu0 0
    %138 = vmatpush2.bf16.msra.mxu0 0
    %139 = vmatprep.subr.bf16.mxu0 0
    %140 = vmatpush2.bf16.msra.mxu0 0
    %141 = vmatprep.mubr.bf16.mxu0 0
    %142 = vmatmul.mubr.bf16.gmra.mxu0 %v107
    %v143 = vpop.f32.mrf.mxu0
    %v144 = vadd.f32 %v91, %v143
    %v145 = vpop.f32.mrf.mxu0
    %v146 = vpop.f32.mrf.mxu0
    %v147 = vpop.f32.mrf.mxu0
    %148 = vdwg.mxu0
    %v149 = vmax.f32 %v144, 0.0
    %v150 = vpack.c.bf16 %v149, %v149
    %v151 = vld [vmem:[#allocation7] sm:$0xf]
    %v152 = vld [vmem:[#allocation7 + $0x4] sm:$0xf]
    %v153 = vld [vmem:[#allocation7 + $0x8] sm:$0xf]
    %v154 = vld [vmem:[#allocation7 + $0xc] sm:$0xf]
    %v155 = vld [vmem:[#allocation7 + $0x10] sm:$0xf]
    %v156 = vld [vmem:[#allocation7 + $0x14] sm:$0xf]
    %v157 = vld [vmem:[#allocation7 + $0x18] sm:$0xf]
    %v158 = vld [vmem:[#allocation7 + $0x1c] sm:$0xf]
    %v159 = vld [vmem:[%s4] sm:$0x1]
    %v161 = vlaneseq
    %v162 = vshrl.u32 %v161, 7
    %v163 = vsub.s32 0, %v162
    %v164 = vrot.slane %v159, %v163
    %v174 = vunpack.c.l.b16 %v151
    %v175 = vunpack.c.l.b16 %v152
    %v176 = vunpack.c.l.b16 %v153
    %v177 = vunpack.c.l.b16 %v154
    %v178 = vunpack.c.l.b16 %v155
    %v179 = vunpack.c.l.b16 %v156
    %v180 = vunpack.c.l.b16 %v157
    %v181 = vunpack.c.l.b16 %v158
    %v182 = vpack.c.b16 %v175, %v174
    %v183 = vpack.c.b16 %v177, %v176
    %v184 = vpack.c.b16 %v179, %v178
    %v185 = vpack.c.b16 %v181, %v180
    %vm190 = vcmask 523264
    %v192 = vsel %vm190, %v150, 0
    %194 = vmatprep.subr.bf16.mxu0 0
    %195 = vmatpush1.bf16.msra.mxu0 0
    %196 = vmatprep.subr.bf16.mxu0 0
    %197 = vmatpush1.bf16.msra.mxu0 0
    %198 = vmatprep.subr.bf16.mxu0 0
    %199 = vmatpush1.bf16.msra.mxu0 0
    %200 = vmatprep.subr.bf16.mxu0 0
    %201 = vmatpush1.bf16.msra.mxu0 0
    %202 = vmatprep.subr.bf16.mxu0 0
    %203 = vmatpush1.bf16.msra.mxu0 %v185
    %204 = vmatprep.subr.bf16.mxu0 0
    %205 = vmatpush1.bf16.msra.mxu0 %v184
    %206 = vmatprep.subr.bf16.mxu0 0
    %207 = vmatpush1.bf16.msra.mxu0 %v183
    %208 = vmatprep.subr.bf16.mxu0 0
    %209 = vmatpush1.bf16.msra.mxu0 %v182
    %210 = vmatprep.subr.bf16.mxu0 0
    %211 = vmatpush2.bf16.msra.mxu0 0
    %212 = vmatprep.subr.bf16.mxu0 0
    %213 = vmatpush2.bf16.msra.mxu0 0
    %214 = vmatprep.subr.bf16.mxu0 0
    %215 = vmatpush2.bf16.msra.mxu0 0
    %216 = vmatprep.subr.bf16.mxu0 0
    %217 = vmatpush2.bf16.msra.mxu0 0
    %218 = vmatprep.subr.bf16.mxu0 0
    %219 = vmatpush2.bf16.msra.mxu0 0
    %220 = vmatprep.subr.bf16.mxu0 0
    %221 = vmatpush2.bf16.msra.mxu0 0
    %222 = vmatprep.subr.bf16.mxu0 0
    %223 = vmatpush2.bf16.msra.mxu0 0
    %224 = vmatprep.subr.bf16.mxu0 0
    %225 = vmatpush2.bf16.msra.mxu0 0
    %226 = vmatprep.mubr.bf16.mxu0 0
    %227 = vmatmul.mubr.bf16.gmra.mxu0 %v192
    %v228 = vpop.f32.mrf.mxu0
    %v229 = vadd.f32 %v164, %v228
    %v230 = vpop.f32.mrf.mxu0
    %v231 = vpop.f32.mrf.mxu0
    %v232 = vpop.f32.mrf.mxu0
    %233 = vdwg.mxu0
    %v234 = vmax.f32 %v229, 0.0
    %v235 = vpack.c.bf16 %v234, %v234
    %v236 = vld [vmem:[#allocation8] sm:$0xf]
    %v237 = vld [vmem:[#allocation8 + $0x4] sm:$0xf]
    %v238 = vld [vmem:[#allocation8 + $0x8] sm:$0xf]
    %v239 = vld [vmem:[#allocation8 + $0xc] sm:$0xf]
    %v240 = vld [vmem:[#allocation8 + $0x10] sm:$0xf]
    %v241 = vld [vmem:[#allocation8 + $0x14] sm:$0xf]
    %v242 = vld [vmem:[#allocation8 + $0x18] sm:$0xf]
    %v243 = vld [vmem:[#allocation8 + $0x1c] sm:$0xf]
    %v244 = vld [vmem:[%s6] sm:$0x1]
    %v246 = vlaneseq
    %v247 = vshrl.u32 %v246, 7
    %v248 = vsub.s32 0, %v247
    %v249 = vrot.slane %v244, %v248
    %v259 = vunpack.c.l.b16 %v236
    %v260 = vunpack.c.l.b16 %v237
    %v261 = vunpack.c.l.b16 %v238
    %v262 = vunpack.c.l.b16 %v239
    %v263 = vunpack.c.l.b16 %v240
    %v264 = vunpack.c.l.b16 %v241
    %v265 = vunpack.c.l.b16 %v242
    %v266 = vunpack.c.l.b16 %v243
    %v267 = vpack.c.b16 %v260, %v259
    %v268 = vpack.c.b16 %v262, %v261
    %v269 = vpack.c.b16 %v264, %v263
    %v270 = vpack.c.b16 %v266, %v265
    %v276 = vsel %vm190, %v235, 0
    %278 = vmatprep.subr.bf16.mxu0 0
    %279 = vmatpush1.bf16.msra.mxu0 0
    %280 = vmatprep.subr.bf16.mxu0 0
    %281 = vmatpush1.bf16.msra.mxu0 0
    %282 = vmatprep.subr.bf16.mxu0 0
    %283 = vmatpush1.bf16.msra.mxu0 0
    %284 = vmatprep.subr.bf16.mxu0 0
    %285 = vmatpush1.bf16.msra.mxu0 0
    %286 = vmatprep.subr.bf16.mxu0 0
    %287 = vmatpush1.bf16.msra.mxu0 %v270
    %288 = vmatprep.subr.bf16.mxu0 0
    %289 = vmatpush1.bf16.msra.mxu0 %v269
    %290 = vmatprep.subr.bf16.mxu0 0
    %291 = vmatpush1.bf16.msra.mxu0 %v268
    %292 = vmatprep.subr.bf16.mxu0 0
    %293 = vmatpush1.bf16.msra.mxu0 %v267
    %294 = vmatprep.subr.bf16.mxu0 0
    %295 = vmatpush2.bf16.msra.mxu0 0
    %296 = vmatprep.subr.bf16.mxu0 0
    %297 = vmatpush2.bf16.msra.mxu0 0
    %298 = vmatprep.subr.bf16.mxu0 0
    %299 = vmatpush2.bf16.msra.mxu0 0
    %300 = vmatprep.subr.bf16.mxu0 0
    %301 = vmatpush2.bf16.msra.mxu0 0
    %302 = vmatprep.subr.bf16.mxu0 0
    %303 = vmatpush2.bf16.msra.mxu0 0
    %304 = vmatprep.subr.bf16.mxu0 0
    %305 = vmatpush2.bf16.msra.mxu0 0
    %306 = vmatprep.subr.bf16.mxu0 0
    %307 = vmatpush2.bf16.msra.mxu0 0
    %308 = vmatprep.subr.bf16.mxu0 0
    %309 = vmatpush2.bf16.msra.mxu0 0
    %310 = vmatprep.mubr.bf16.mxu0 0
    %311 = vmatmul.mubr.bf16.gmra.mxu0 %v276
    %v312 = vpop.f32.mrf.mxu0
    %v313 = vadd.f32 %v249, %v312
    %v314 = vpop.f32.mrf.mxu0
    %v315 = vpop.f32.mrf.mxu0
    %v316 = vpop.f32.mrf.mxu0
    %317 = vdwg.mxu0
    %318 = vst [vmem:[#allocation10] sm:$0xff] %v313
    // Predicated region
    $region46: #{tpu_custom_call.1} parent=1 // pred_check
      _
    $region47: #{tpu_custom_call.1} parent=1 // pred_check_branch
      %320 = sbr.rel (0) target = $region49
    $region48: #{tpu_custom_call.1} parent=1 // pred_region
      %s322 = ssub.s32 128, 128
      %323 = vsyncadd [#allocation4], %s322
      %s325 = sshll.u32 [#allocation10], 4
      %s326 = int_to_ptr.vmem [resolvable:$true] %s325
      %328 = dma.vmem_to_hbm [thread:$0]  %s326, 128, %s7, [#allocation4]
    $region49: #{tpu_custom_call.1} parent=1 // pred_fallthru
      _
    // Predicated region
    $region50: #{tpu_custom_call.1} parent=1 // pred_check
      _
    $region51: #{tpu_custom_call.1} parent=1 // pred_check_branch
      %330 = sbr.rel (0) target = $region53
    $region52: #{tpu_custom_call.1} parent=1 // pred_region
      %331 = dma.done [#allocation4], 128
    $region53: #{tpu_custom_call.1} parent=1 // pred_fallthru
      _
    %332 = vsyncpa [#allocation3], 1
    %333 = vsyncpa [#allocation6], 1
    %334 = vsyncpa [#allocation9], 1
    %335 = vsyncpa [#allocation4], 1

</llo_original>
